<compile_context>
chip_gen: v6e
topology: v6e:2x2x1
jax: 0.10.0
libtpu: 0.0.40
codegen_flags: <defaults>
</compile_context>

<pallas_src>
import functools

import jax
import jax.numpy as jnp
from jax.experimental import pallas as pl
from jax.experimental.pallas import tpu as pltpu


def _round_up(n: int, m: int) -> int:
    return (n + m - 1) // m * m


def _fcnet_kernel(*refs, n_layers: int, mxu_dtype):
    # refs = (x_ref, w1_ref, b1_ref, ..., wN_ref, bN_ref, o_ref)
    x_ref = refs[0]
    o_ref = refs[-1]
    wb_refs = refs[1:-1]

    h = x_ref[...].astype(jnp.float32)
    for l in range(n_layers):
        w = wb_refs[2 * l][...]                       # (F_in, F_out), loaded once
        b = wb_refs[2 * l + 1][...].astype(jnp.float32)   # (1, F_out), broadcast over rows
        if mxu_dtype is not None:
            lhs = h.astype(mxu_dtype)
            rhs = w.astype(mxu_dtype)
        else:
            lhs = h
            rhs = w.astype(jnp.float32)
        h = jnp.dot(lhs, rhs, preferred_element_type=jnp.float32) + b
        if l < n_layers - 1:
            h = jnp.tanh(h)                           # EUP slot; effectively free
    o_ref[...] = h.astype(o_ref.dtype)


def prepare_fcnet_params(params, weight_dtype=None):
    """One-time parameter prep (hoisted out of the forward): bias -> (1, F) rows,
    optional weight dtype cast (e.g. bf16 for v6e/v7x MXU)."""
    prepped = []
    for (w, b) in params:
        if weight_dtype is not None:
            w = w.astype(weight_dtype)
        prepped.append((w, jnp.reshape(b, (1, -1))))
    return prepped


@functools.partial(jax.jit, static_argnames=("batch_tile", "mxu_dtype"))
def fcnet_forward(params, x, *, batch_tile: int = 512, mxu_dtype=None):
    """Fused MLP forward: one pallas_call for all layers, batch tiled on a parallel grid.

    `params` must come from `prepare_fcnet_params` (biases shaped (1, F_out))."""
    B, F_in = x.shape
    n_layers = len(params)
    F_out = params[-1][0].shape[1]

    # Batch tile: multiple of 8 sublanes, no bigger than needed.
    bt = max(8, _round_up(min(batch_tile, B), 8))
    pB = _round_up(B, bt)

    # Row-pad the batch only if needed (no lane padding: natural feature width).
    xp = x if pB == B else jnp.zeros((pB, F_in), x.dtype).at[:B].set(x)

    in_specs = [pl.BlockSpec((bt, F_in), lambda i: (i, 0))]
    flat_inputs = [xp]
    for (w, b) in params:
        # Full array as one block, constant in the batch axis -> VMEM-resident.
        in_specs.append(pl.BlockSpec(w.shape, lambda i: (0, 0)))
        in_specs.append(pl.BlockSpec(b.shape, lambda i: (0, 0)))
        flat_inputs += [w, b]

    out_spec = pl.BlockSpec((bt, F_out), lambda i: (i, 0))

    itemsize = jnp.dtype(x.dtype).itemsize
    flops = 2 * pB * sum(int(w.shape[0]) * int(w.shape[1]) for (w, _) in params)
    transcendentals = pB * sum(int(w.shape[1]) for (w, _) in params[:-1])
    bytes_accessed = (
        int(xp.size) * int(xp.dtype.itemsize)
        + pB * F_out * itemsize
        + sum(int(w.size) * int(w.dtype.itemsize)
              + int(b.size) * int(b.dtype.itemsize) for (w, b) in params)
    )

    kernel = functools.partial(_fcnet_kernel, n_layers=n_layers, mxu_dtype=mxu_dtype)
    out = pl.pallas_call(
        kernel,
        out_shape=jax.ShapeDtypeStruct((pB, F_out), x.dtype),
        grid=(pB // bt,),
        in_specs=in_specs,
        out_specs=out_spec,
        compiler_params=pltpu.CompilerParams(
            # Batch axis is independent -> shard across TCs where supported.
            dimension_semantics=("parallel",),
            # Explicit limit: safe on v5e (16 MiB scoped default) and v7x (64 MiB phys).
            vmem_limit_bytes=32 * 1024 * 1024,
        ),
        cost_estimate=pl.CostEstimate(
            flops=flops,
            transcendentals=transcendentals,
            bytes_accessed=bytes_accessed,
        ),
    )(*flat_inputs)

    return out if pB == B else out[:B]


def init_fcnet_params(key, layers_list, dtype=jnp.float32):
    """Deterministic init mimicking nn.Linear default: U(-1/sqrt(fan_in), 1/sqrt(fan_in))."""
    params = []
    fan_in = layers_list[0]
    for fan_out in layers_list[1:]:
        key, kw, kb = jax.random.split(key, 3)
        bound = 1.0 / jnp.sqrt(jnp.array(fan_in, dtype=jnp.float32))
        # stored as (in, out) so kernel does x @ W
        w = jax.random.uniform(kw, (fan_in, fan_out), dtype=dtype,
                               minval=-bound, maxval=bound)
        b = jax.random.uniform(kb, (fan_out,), dtype=dtype,
                               minval=-bound, maxval=bound)
        params.append((w, b))
        fan_in = fan_out
    return params


def fcnet_reference(params, x):
    """Plain-JAX reference for validation (matches FCNet.forward with Tanh)."""
    n = len(params)
    for i, (w, b) in enumerate(params):
        x = x @ w + b
        if i < n - 1:
            x = jnp.tanh(x)
    return x


if __name__ == "__main__":
    key = jax.random.PRNGKey(0)
    layers_list = [16, 32, 32, 8]   # FCNet(layers_list=[16, 32, 32, 8], activation='Tanh')

    k_params, k_x1, k_x2, k_x3 = jax.random.split(key, 4)
    raw_params = init_fcnet_params(k_params, layers_list, dtype=jnp.float32)
    params = prepare_fcnet_params(raw_params)          # one-time prep (hoisted)

    # Small-batch check (single grid step).
    batch = 8
    x = jax.random.normal(k_x1, (batch, layers_list[0]), dtype=jnp.float32)
    out = jax.block_until_ready(fcnet_forward(params, x))
    ref = fcnet_reference(raw_params, x)
    assert out.shape == (batch, layers_list[-1])
    assert jnp.allclose(out, ref, atol=1e-5, rtol=1e-5), "Pallas mismatch vs reference (B=8)"

    # Larger batch exercising a multi-step parallel batch grid (2 tiles of 128).
    batch2 = 256
    x2 = jax.random.normal(k_x2, (batch2, layers_list[0]), dtype=jnp.float32)
    out2 = jax.block_until_ready(fcnet_forward(params, x2, batch_tile=128))
    ref2 = fcnet_reference(raw_params, x2)
    assert out2.shape == (batch2, layers_list[-1])
    assert jnp.allclose(out2, ref2, atol=1e-5, rtol=1e-5), "Pallas mismatch vs reference (B=256)"

    # Ragged batch (row padding path) with a non-default tile.
    batch3 = 100
    x3 = jax.random.normal(k_x3, (batch3, layers_list[0]), dtype=jnp.float32)
    out3 = jax.block_until_ready(fcnet_forward(params, x3, batch_tile=64))
    ref3 = fcnet_reference(raw_params, x3)
    assert out3.shape == (batch3, layers_list[-1])
    assert jnp.allclose(out3, ref3, atol=1e-5, rtol=1e-5), "Pallas mismatch vs reference (B=100)"

    # bf16-MXU-operand path (v6e/v7x native MXU rate); looser tolerance by design.
    out_bf16 = jax.block_until_ready(
        fcnet_forward(params, x2, batch_tile=128, mxu_dtype=jnp.bfloat16))
    assert out_bf16.shape == (batch2, layers_list[-1])
    assert jnp.allclose(out_bf16, ref2, atol=5e-2, rtol=5e-2), "bf16 path diverged too far"

    print("KERNEL_OK")
</pallas_src>

<mosaic_0001>
module attributes {stable_mosaic.version = 11 : i64} {
  func.func @_fcnet_kernel(%arg0: i32, %arg1: memref<8x16xf32, #tpu.memory_space<vmem>>, %arg2: memref<16x32xf32, #tpu.memory_space<vmem>>, %arg3: memref<1x32xf32, #tpu.memory_space<vmem>>, %arg4: memref<32x32xf32, #tpu.memory_space<vmem>>, %arg5: memref<1x32xf32, #tpu.memory_space<vmem>>, %arg6: memref<32x8xf32, #tpu.memory_space<vmem>>, %arg7: memref<1x8xf32, #tpu.memory_space<vmem>>, %arg8: memref<8x8xf32, #tpu.memory_space<vmem>>) attributes {dimension_semantics = [#tpu.dimension_semantics<parallel>], iteration_bounds = array<i64: 1>, scalar_prefetch = 0 : i64, scratch_operands = 0 : i64, tpu.core_type = #tpu.core_type<tc>, window_params = [{transform_indices = @transform_0, window_bounds = array<i64: 8, 16>}, {pipeline_mode = #tpu.pipeline_mode<synchronous>, transform_indices = @transform_1, window_bounds = array<i64: 16, 32>}, {pipeline_mode = #tpu.pipeline_mode<synchronous>, transform_indices = @transform_2, window_bounds = array<i64: 1, 32>}, {pipeline_mode = #tpu.pipeline_mode<synchronous>, transform_indices = @transform_3, window_bounds = array<i64: 32, 32>}, {pipeline_mode = #tpu.pipeline_mode<synchronous>, transform_indices = @transform_4, window_bounds = array<i64: 1, 32>}, {pipeline_mode = #tpu.pipeline_mode<synchronous>, transform_indices = @transform_5, window_bounds = array<i64: 32, 8>}, {pipeline_mode = #tpu.pipeline_mode<synchronous>, transform_indices = @transform_6, window_bounds = array<i64: 1, 8>}, {transform_indices = @transform_7, window_bounds = array<i64: 8, 8>}]} {
    %c0 = arith.constant 0 : index
    %c0_0 = arith.constant 0 : index
    %0 = vector.load %arg1[%c0, %c0_0] : memref<8x16xf32, #tpu.memory_space<vmem>>, vector<8x16xf32>
    %c0_1 = arith.constant 0 : index
    %c0_2 = arith.constant 0 : index
    %1 = vector.load %arg2[%c0_1, %c0_2] : memref<16x32xf32, #tpu.memory_space<vmem>>, vector<16x32xf32>
    %c0_3 = arith.constant 0 : index
    %c0_4 = arith.constant 0 : index
    %2 = vector.load %arg3[%c0_3, %c0_4] : memref<1x32xf32, #tpu.memory_space<vmem>>, vector<1x32xf32>
    %cst = arith.constant dense<0.000000e+00> : vector<8x32xf32>
    %3 = tpu.matmul %0, %1, %cst {dimension_numbers = #tpu.dot_dimension_numbers<[1], [0], [0], [1], [0, 0, 1, 1], [], []>} : vector<8x16xf32>, vector<16x32xf32>, vector<8x32xf32> -> vector<8x32xf32>
    %4 = vector.broadcast %2 : vector<1x32xf32> to vector<8x32xf32>
    %5 = arith.addf %3, %4 : vector<8x32xf32>
    %6 = math.tanh %5 : vector<8x32xf32>
    %c0_5 = arith.constant 0 : index
    %c0_6 = arith.constant 0 : index
    %7 = vector.load %arg4[%c0_5, %c0_6] : memref<32x32xf32, #tpu.memory_space<vmem>>, vector<32x32xf32>
    %c0_7 = arith.constant 0 : index
    %c0_8 = arith.constant 0 : index
    %8 = vector.load %arg5[%c0_7, %c0_8] : memref<1x32xf32, #tpu.memory_space<vmem>>, vector<1x32xf32>
    %cst_9 = arith.constant dense<0.000000e+00> : vector<8x32xf32>
    %9 = tpu.matmul %6, %7, %cst_9 {dimension_numbers = #tpu.dot_dimension_numbers<[1], [0], [0], [1], [0, 0, 1, 1], [], []>} : vector<8x32xf32>, vector<32x32xf32>, vector<8x32xf32> -> vector<8x32xf32>
    %10 = vector.broadcast %8 : vector<1x32xf32> to vector<8x32xf32>
    %11 = arith.addf %9, %10 : vector<8x32xf32>
    %12 = math.tanh %11 : vector<8x32xf32>
    %c0_10 = arith.constant 0 : index
    %c0_11 = arith.constant 0 : index
    %13 = vector.load %arg6[%c0_10, %c0_11] : memref<32x8xf32, #tpu.memory_space<vmem>>, vector<32x8xf32>
    %c0_12 = arith.constant 0 : index
    %c0_13 = arith.constant 0 : index
    %14 = vector.load %arg7[%c0_12, %c0_13] : memref<1x8xf32, #tpu.memory_space<vmem>>, vector<1x8xf32>
    %cst_14 = arith.constant dense<0.000000e+00> : vector<8x8xf32>
    %15 = tpu.matmul %12, %13, %cst_14 {dimension_numbers = #tpu.dot_dimension_numbers<[1], [0], [0], [1], [0, 0, 1, 1], [], []>} : vector<8x32xf32>, vector<32x8xf32>, vector<8x8xf32> -> vector<8x8xf32>
    %16 = vector.broadcast %14 : vector<1x8xf32> to vector<8x8xf32>
    %17 = arith.addf %15, %16 : vector<8x8xf32>
    %c0_15 = arith.constant 0 : index
    %c0_16 = arith.constant 0 : index
    %18 = vector.load %arg8[%c0_15, %c0_16] : memref<8x8xf32, #tpu.memory_space<vmem>>, vector<8x8xf32>
    tpu.vector_store %arg8[%c0_15, %c0_16], %17 {strides = array<i32>} : memref<8x8xf32, #tpu.memory_space<vmem>>, vector<8x8xf32>,
    return
  }
  func.func @transform_0(%arg0: i32) -> (i32, i32) {
    %c0_i32 = arith.constant 0 : i32
    %c0_i32_0 = arith.constant 0 : i32
    return %arg0, %c0_i32 : i32, i32
  }
  func.func @transform_1(%arg0: i32) -> (i32, i32) {
    %c0_i32 = arith.constant 0 : i32
    %c0_i32_0 = arith.constant 0 : i32
    %c0_i32_1 = arith.constant 0 : i32
    return %c0_i32, %c0_i32_0 : i32, i32
  }
  func.func @transform_2(%arg0: i32) -> (i32, i32) {
    %c0_i32 = arith.constant 0 : i32
    %c0_i32_0 = arith.constant 0 : i32
    %c0_i32_1 = arith.constant 0 : i32
    return %c0_i32, %c0_i32_0 : i32, i32
  }
  func.func @transform_3(%arg0: i32) -> (i32, i32) {
    %c0_i32 = arith.constant 0 : i32
    %c0_i32_0 = arith.constant 0 : i32
    %c0_i32_1 = arith.constant 0 : i32
    return %c0_i32, %c0_i32_0 : i32, i32
  }
  func.func @transform_4(%arg0: i32) -> (i32, i32) {
    %c0_i32 = arith.constant 0 : i32
    %c0_i32_0 = arith.constant 0 : i32
    %c0_i32_1 = arith.constant 0 : i32
    return %c0_i32, %c0_i32_0 : i32, i32
  }
  func.func @transform_5(%arg0: i32) -> (i32, i32) {
    %c0_i32 = arith.constant 0 : i32
    %c0_i32_0 = arith.constant 0 : i32
    %c0_i32_1 = arith.constant 0 : i32
    return %c0_i32, %c0_i32_0 : i32, i32
  }
  func.func @transform_6(%arg0: i32) -> (i32, i32) {
    %c0_i32 = arith.constant 0 : i32
    %c0_i32_0 = arith.constant 0 : i32
    %c0_i32_1 = arith.constant 0 : i32
    return %c0_i32, %c0_i32_0 : i32, i32
  }
  func.func @transform_7(%arg0: i32) -> (i32, i32) {
    %c0_i32 = arith.constant 0 : i32
    %c0_i32_0 = arith.constant 0 : i32
    return %arg0, %c0_i32 : i32, i32
  }
}

</mosaic_0001>

<llo_original>
// kernel: fcnet_forward.1
$region0: #{fcnet_forward.1}
  #allocation0 [shape = 'u32[]', space=smem, size = 0x4, offset = 0x4, fixed_abs, tag = 'smem constant byte address 0x4 - core index']
  #allocation1 [shape = 'u32[144,128]{1,0:T(1,128)}', space=vmem, size = 0x12000, scoped, tag = 'internal scratch']
  %s0 = inlined_call_operand.vmem [shape: f32[8,16], index: 0, kind: input, shape index: {}]
  %s1 = inlined_call_operand.hbm [shape: f32[16,32], index: 1, kind: input, shape index: {}]
  %s2 = inlined_call_operand.vmem [shape: f32[1,32], index: 2, kind: input, shape index: {}]
  %s3 = inlined_call_operand.vmem [shape: f32[32,32], index: 3, kind: input, shape index: {}]
  %s4 = inlined_call_operand.vmem [shape: f32[1,32], index: 4, kind: input, shape index: {}]
  %s5 = inlined_call_operand.vmem [shape: f32[32,8], index: 5, kind: input, shape index: {}]
  %s6 = inlined_call_operand.vmem [shape: f32[1,8], index: 6, kind: input, shape index: {}]
  %s7 = inlined_call_operand.hbm [shape: f32[8,8], index: 7, kind: output, shape index: {}]
  %s8 = sld [smem:[#allocation0]]
  $region42: #{fcnet_forward.1} parent=0
    _
  %s10 = ssub.s32 1, %s8
  %s11 = scalar_select 0, %s10, %s8
  $region1: #{fcnet_forward.1} parent=0
    #allocation2 [shape = 'u8[8192]{0}', space=vmem, size = 0x2000, scoped, tag = 'input window, operand 1, single buffered']
    #allocation3 [shape = 's32[1]{0}', space=sflag, size = 0x4, scoped, tag = 'scoped memory for fcnet_forward.1']
    #allocation4 [shape = 's32[1]{0}', space=sflag, size = 0x4, scoped, tag = 'scoped memory for fcnet_forward.1']
    #allocation5 [shape = 'u8[4096]{0}', space=vmem, size = 0x1000, scoped, tag = 'output window, operand 0, single buffered']
    %12 = vsyncpa [#allocation3], 0
    %13 = vsyncpa [#allocation4], 0
    // Predicated region
    $region2: #{fcnet_forward.1} parent=1 // pred_check
      _
    $region3: #{fcnet_forward.1} parent=1 // pred_check_branch
      %15 = sbr.rel (0) target = $region5
    $region4: #{fcnet_forward.1} parent=1 // pred_region
      _
    $region5: #{fcnet_forward.1} parent=1 // pred_fallthru
      _
    // Predicated region
    $region6: #{fcnet_forward.1} parent=1 // pred_check
      _
    $region7: #{fcnet_forward.1} parent=1 // pred_check_branch
      %17 = sbr.rel (0) target = $region9
    $region8: #{fcnet_forward.1} parent=1 // pred_region
      %s19 = ssub.s32 256, 256
      %20 = vsyncadd [#allocation3], %s19
      %s21 = sshll.u32 [#allocation2], 4
      %s22 = int_to_ptr.vmem [resolvable:$true] %s21
      %27 = dma.hbm_to_vmem [thread:$0]  %s1, 256, %s22, [#allocation3], 128, 128, 8
    $region9: #{fcnet_forward.1} parent=1 // pred_fallthru
      _
    // Predicated region
    $region10: #{fcnet_forward.1} parent=1 // pred_check
      _
    $region11: #{fcnet_forward.1} parent=1 // pred_check_branch
      %29 = sbr.rel (0) target = $region13
    $region12: #{fcnet_forward.1} parent=1 // pred_region
      _
    $region13: #{fcnet_forward.1} parent=1 // pred_fallthru
      _
    // Predicated region
    $region14: #{fcnet_forward.1} parent=1 // pred_check
      _
    $region15: #{fcnet_forward.1} parent=1 // pred_check_branch
      %31 = sbr.rel (0) target = $region17
    $region16: #{fcnet_forward.1} parent=1 // pred_region
      _
    $region17: #{fcnet_forward.1} parent=1 // pred_fallthru
      _
    // Predicated region
    $region18: #{fcnet_forward.1} parent=1 // pred_check
      _
    $region19: #{fcnet_forward.1} parent=1 // pred_check_branch
      %33 = sbr.rel (0) target = $region21
    $region20: #{fcnet_forward.1} parent=1 // pred_region
      _
    $region21: #{fcnet_forward.1} parent=1 // pred_fallthru
      _
    // Predicated region
    $region22: #{fcnet_forward.1} parent=1 // pred_check
      _
    $region23: #{fcnet_forward.1} parent=1 // pred_check_branch
      %35 = sbr.rel (0) target = $region25
    $region24: #{fcnet_forward.1} parent=1 // pred_region
      _
    $region25: #{fcnet_forward.1} parent=1 // pred_fallthru
      _
    // Predicated region
    $region26: #{fcnet_forward.1} parent=1 // pred_check
      _
    $region27: #{fcnet_forward.1} parent=1 // pred_check_branch
      %37 = sbr.rel (0) target = $region29
    $region28: #{fcnet_forward.1} parent=1 // pred_region
      _
    $region29: #{fcnet_forward.1} parent=1 // pred_fallthru
      _
    // Predicated region
    $region30: #{fcnet_forward.1} parent=1 // pred_check
      _
    $region31: #{fcnet_forward.1} parent=1 // pred_check_branch
      %39 = sbr.rel (0) target = $region33
    $region32: #{fcnet_forward.1} parent=1 // pred_region
      %40 = dma.done [#allocation3], 256
    $region33: #{fcnet_forward.1} parent=1 // pred_fallthru
      _
    %v41 = vld [vmem:[%s0] sm:$0xff]
    %v42 = vld [vmem:[#allocation2] sm:$0xff]
    %v43 = vld [vmem:[#allocation2 + $0x8] sm:$0xff]
    %v44 = vld [vmem:[%s2] sm:$0x1]
    %v46 = vlaneseq
    %v47 = vshrl.u32 %v46, 7
    %v48 = vsub.s32 0, %v47
    %v49 = vrot.slane %v44, %v48
    %vm51 = vcmask 130048
    %v53 = vsel %vm51, %v41, 0
    %55 = vmatprep.subr.mxu0 0.0
    %56 = vmatpush1.msra.mxu0 0.0
    %57 = vmatprep.subr.mxu0 0.0
    %58 = vmatpush1.msra.mxu0 0.0
    %59 = vmatprep.subr.mxu0 0.0
    %60 = vmatpush1.msra.mxu0 0.0
    %61 = vmatprep.subr.mxu0 0.0
    %62 = vmatpush1.msra.mxu0 0.0
    %63 = vmatprep.subr.mxu0 0.0
    %64 = vmatpush1.msra.mxu0 0.0
    %65 = vmatprep.subr.mxu0 0.0
    %66 = vmatpush1.msra.mxu0 0.0
    %67 = vmatprep.subr.mxu0 0.0
    %68 = vmatpush1.msra.mxu0 0.0
    %69 = vmatprep.subr.mxu0 0.0
    %70 = vmatpush1.msra.mxu0 0.0
    %71 = vmatprep.subr.mxu0 0.0
    %72 = vmatpush1.msra.mxu0 0.0
    %73 = vmatprep.subr.mxu0 0.0
    %74 = vmatpush1.msra.mxu0 0.0
    %75 = vmatprep.subr.mxu0 0.0
    %76 = vmatpush1.msra.mxu0 0.0
    %77 = vmatprep.subr.mxu0 0.0
    %78 = vmatpush1.msra.mxu0 0.0
    %79 = vmatprep.subr.mxu0 0.0
    %80 = vmatpush1.msra.mxu0 0.0
    %81 = vmatprep.subr.mxu0 0.0
    %82 = vmatpush1.msra.mxu0 0.0
    %83 = vmatprep.subr.mxu0 0.0
    %84 = vmatpush1.msra.mxu0 %v43
    %85 = vmatprep.subr.mxu0 0.0
    %86 = vmatpush1.msra.mxu0 %v42
    %87 = vmatprep.subr.mxu0 0.0
    %88 = vmatpush2.msra.mxu0 0.0
    %89 = vmatprep.subr.mxu0 0.0
    %90 = vmatpush2.msra.mxu0 0.0
    %91 = vmatprep.subr.mxu0 0.0
    %92 = vmatpush2.msra.mxu0 0.0
    %93 = vmatprep.subr.mxu0 0.0
    %94 = vmatpush2.msra.mxu0 0.0
    %95 = vmatprep.subr.mxu0 0.0
    %96 = vmatpush2.msra.mxu0 0.0
    %97 = vmatprep.subr.mxu0 0.0
    %98 = vmatpush2.msra.mxu0 0.0
    %99 = vmatprep.subr.mxu0 0.0
    %100 = vmatpush2.msra.mxu0 0.0
    %101 = vmatprep.subr.mxu0 0.0
    %102 = vmatpush2.msra.mxu0 0.0
    %103 = vmatprep.subr.mxu0 0.0
    %104 = vmatpush2.msra.mxu0 0.0
    %105 = vmatprep.subr.mxu0 0.0
    %106 = vmatpush2.msra.mxu0 0.0
    %107 = vmatprep.subr.mxu0 0.0
    %108 = vmatpush2.msra.mxu0 0.0
    %109 = vmatprep.subr.mxu0 0.0
    %110 = vmatpush2.msra.mxu0 0.0
    %111 = vmatprep.subr.mxu0 0.0
    %112 = vmatpush2.msra.mxu0 0.0
    %113 = vmatprep.subr.mxu0 0.0
    %114 = vmatpush2.msra.mxu0 0.0
    %115 = vmatprep.subr.mxu0 0.0
    %116 = vmatpush2.msra.mxu0 0.0
    %117 = vmatprep.subr.mxu0 0.0
    %118 = vmatpush2.msra.mxu0 0.0
    %119 = vmatprep.mubr.f32.mxu0 0.0
    %120 = vmatmul.mubr.f32.gmra.mxu0 %v53
    %v121 = vpop.f32.mrf.mxu0
    %v122 = vadd.f32 %v49, %v121
    %v123 = vpop.f32.mrf.mxu0
    %124 = vdwg.mxu0
    %v125 = vtanh.pop %v122
    %v126 = vld [vmem:[%s3] sm:$0xff]
    %v127 = vld [vmem:[%s3 + $0x8] sm:$0xff]
    %v128 = vld [vmem:[%s3 + $0x10] sm:$0xff]
    %v129 = vld [vmem:[%s3 + $0x18] sm:$0xff]
    %v130 = vld [vmem:[%s4] sm:$0x1]
    %v132 = vlaneseq
    %v133 = vshrl.u32 %v132, 7
    %v134 = vsub.s32 0, %v133
    %v135 = vrot.slane %v130, %v134
    %vm137 = vcmask 261120
    %v139 = vsel %vm137, %v125, 0
    %141 = vmatprep.subr.mxu0 0.0
    %142 = vmatpush1.msra.mxu0 0.0
    %143 = vmatprep.subr.mxu0 0.0
    %144 = vmatpush1.msra.mxu0 0.0
    %145 = vmatprep.subr.mxu0 0.0
    %146 = vmatpush1.msra.mxu0 0.0
    %147 = vmatprep.subr.mxu0 0.0
    %148 = vmatpush1.msra.mxu0 0.0
    %149 = vmatprep.subr.mxu0 0.0
    %150 = vmatpush1.msra.mxu0 0.0
    %151 = vmatprep.subr.mxu0 0.0
    %152 = vmatpush1.msra.mxu0 0.0
    %153 = vmatprep.subr.mxu0 0.0
    %154 = vmatpush1.msra.mxu0 0.0
    %155 = vmatprep.subr.mxu0 0.0
    %156 = vmatpush1.msra.mxu0 0.0
    %157 = vmatprep.subr.mxu0 0.0
    %158 = vmatpush1.msra.mxu0 0.0
    %159 = vmatprep.subr.mxu0 0.0
    %160 = vmatpush1.msra.mxu0 0.0
    %161 = vmatprep.subr.mxu0 0.0
    %162 = vmatpush1.msra.mxu0 0.0
    %163 = vmatprep.subr.mxu0 0.0
    %164 = vmatpush1.msra.mxu0 0.0
    %165 = vmatprep.subr.mxu0 0.0
    %166 = vmatpush1.msra.mxu0 %v129
    %167 = vmatprep.subr.mxu0 0.0
    %168 = vmatpush1.msra.mxu0 %v128
    %169 = vmatprep.subr.mxu0 0.0
    %170 = vmatpush1.msra.mxu0 %v127
    %171 = vmatprep.subr.mxu0 0.0
    %172 = vmatpush1.msra.mxu0 %v126
    %173 = vmatprep.subr.mxu0 0.0
    %174 = vmatpush2.msra.mxu0 0.0
    %175 = vmatprep.subr.mxu0 0.0
    %176 = vmatpush2.msra.mxu0 0.0
    %177 = vmatprep.subr.mxu0 0.0
    %178 = vmatpush2.msra.mxu0 0.0
    %179 = vmatprep.subr.mxu0 0.0
    %180 = vmatpush2.msra.mxu0 0.0
    %181 = vmatprep.subr.mxu0 0.0
    %182 = vmatpush2.msra.mxu0 0.0
    %183 = vmatprep.subr.mxu0 0.0
    %184 = vmatpush2.msra.mxu0 0.0
    %185 = vmatprep.subr.mxu0 0.0
    %186 = vmatpush2.msra.mxu0 0.0
    %187 = vmatprep.subr.mxu0 0.0
    %188 = vmatpush2.msra.mxu0 0.0
    %189 = vmatprep.subr.mxu0 0.0
    %190 = vmatpush2.msra.mxu0 0.0
    %191 = vmatprep.subr.mxu0 0.0
    %192 = vmatpush2.msra.mxu0 0.0
    %193 = vmatprep.subr.mxu0 0.0
    %194 = vmatpush2.msra.mxu0 0.0
    %195 = vmatprep.subr.mxu0 0.0
    %196 = vmatpush2.msra.mxu0 0.0
    %197 = vmatprep.subr.mxu0 0.0
    %198 = vmatpush2.msra.mxu0 0.0
    %199 = vmatprep.subr.mxu0 0.0
    %200 = vmatpush2.msra.mxu0 0.0
    %201 = vmatprep.subr.mxu0 0.0
    %202 = vmatpush2.msra.mxu0 0.0
    %203 = vmatprep.subr.mxu0 0.0
    %204 = vmatpush2.msra.mxu0 0.0
    %205 = vmatprep.mubr.f32.mxu0 0.0
    %206 = vmatmul.mubr.f32.gmra.mxu0 %v139
    %v207 = vpop.f32.mrf.mxu0
    %v208 = vadd.f32 %v135, %v207
    %v209 = vpop.f32.mrf.mxu0
    %210 = vdwg.mxu0
    %v211 = vtanh.pop %v208
    %v212 = vld [vmem:[%s5] sm:$0xff]
    %v213 = vld [vmem:[%s5 + $0x8] sm:$0xff]
    %v214 = vld [vmem:[%s5 + $0x10] sm:$0xff]
    %v215 = vld [vmem:[%s5 + $0x18] sm:$0xff]
    %v216 = vld [vmem:[%s6] sm:$0x1]
    %v218 = vlaneseq
    %v219 = vshrl.u32 %v218, 7
    %v220 = vsub.s32 0, %v219
    %v221 = vrot.slane %v216, %v220
    %v224 = vsel %vm137, %v211, 0
    %226 = vmatprep.subr.mxu0 0.0
    %227 = vmatpush1.msra.mxu0 0.0
    %228 = vmatprep.subr.mxu0 0.0
    %229 = vmatpush1.msra.mxu0 0.0
    %230 = vmatprep.subr.mxu0 0.0
    %231 = vmatpush1.msra.mxu0 0.0
    %232 = vmatprep.subr.mxu0 0.0
    %233 = vmatpush1.msra.mxu0 0.0
    %234 = vmatprep.subr.mxu0 0.0
    %235 = vmatpush1.msra.mxu0 0.0
    %236 = vmatprep.subr.mxu0 0.0
    %237 = vmatpush1.msra.mxu0 0.0
    %238 = vmatprep.subr.mxu0 0.0
    %239 = vmatpush1.msra.mxu0 0.0
    %240 = vmatprep.subr.mxu0 0.0
    %241 = vmatpush1.msra.mxu0 0.0
    %242 = vmatprep.subr.mxu0 0.0
    %243 = vmatpush1.msra.mxu0 0.0
    %244 = vmatprep.subr.mxu0 0.0
    %245 = vmatpush1.msra.mxu0 0.0
    %246 = vmatprep.subr.mxu0 0.0
    %247 = vmatpush1.msra.mxu0 0.0
    %248 = vmatprep.subr.mxu0 0.0
    %249 = vmatpush1.msra.mxu0 0.0
    %250 = vmatprep.subr.mxu0 0.0
    %251 = vmatpush1.msra.mxu0 %v215
    %252 = vmatprep.subr.mxu0 0.0
    %253 = vmatpush1.msra.mxu0 %v214
    %254 = vmatprep.subr.mxu0 0.0
    %255 = vmatpush1.msra.mxu0 %v213
    %256 = vmatprep.subr.mxu0 0.0
    %257 = vmatpush1.msra.mxu0 %v212
    %258 = vmatprep.subr.mxu0 0.0
    %259 = vmatpush2.msra.mxu0 0.0
    %260 = vmatprep.subr.mxu0 0.0
    %261 = vmatpush2.msra.mxu0 0.0
    %262 = vmatprep.subr.mxu0 0.0
    %263 = vmatpush2.msra.mxu0 0.0
    %264 = vmatprep.subr.mxu0 0.0
    %265 = vmatpush2.msra.mxu0 0.0
    %266 = vmatprep.subr.mxu0 0.0
    %267 = vmatpush2.msra.mxu0 0.0
    %268 = vmatprep.subr.mxu0 0.0
    %269 = vmatpush2.msra.mxu0 0.0
    %270 = vmatprep.subr.mxu0 0.0
    %271 = vmatpush2.msra.mxu0 0.0
    %272 = vmatprep.subr.mxu0 0.0
    %273 = vmatpush2.msra.mxu0 0.0
    %274 = vmatprep.subr.mxu0 0.0
    %275 = vmatpush2.msra.mxu0 0.0
    %276 = vmatprep.subr.mxu0 0.0
    %277 = vmatpush2.msra.mxu0 0.0
    %278 = vmatprep.subr.mxu0 0.0
    %279 = vmatpush2.msra.mxu0 0.0
    %280 = vmatprep.subr.mxu0 0.0
    %281 = vmatpush2.msra.mxu0 0.0
    %282 = vmatprep.subr.mxu0 0.0
    %283 = vmatpush2.msra.mxu0 0.0
    %284 = vmatprep.subr.mxu0 0.0
    %285 = vmatpush2.msra.mxu0 0.0
    %286 = vmatprep.subr.mxu0 0.0
    %287 = vmatpush2.msra.mxu0 0.0
    %288 = vmatprep.subr.mxu0 0.0
    %289 = vmatpush2.msra.mxu0 0.0
    %290 = vmatprep.mubr.f32.mxu0 0.0
    %291 = vmatmul.mubr.f32.gmra.mxu0 %v224
    %v292 = vpop.f32.mrf.mxu0
    %v293 = vadd.f32 %v221, %v292
    %v294 = vpop.f32.mrf.mxu0
    %295 = vdwg.mxu0
    %vm296 = vcmask 64512
    %297 = vst.msk [vmem:[#allocation5] sm:$0xff] %vm296, %v293
    // Predicated region
    $region34: #{fcnet_forward.1} parent=1 // pred_check
      _
    $region35: #{fcnet_forward.1} parent=1 // pred_check_branch
      %299 = sbr.rel (0) target = $region37
    $region36: #{fcnet_forward.1} parent=1 // pred_region
      %s301 = ssub.s32 128, 128
      %302 = vsyncadd [#allocation4], %s301
      %s304 = sshll.u32 [#allocation5], 4
      %s305 = int_to_ptr.vmem [resolvable:$true] %s304
      %307 = dma.vmem_to_hbm [thread:$0]  %s305, 128, %s7, [#allocation4]
    $region37: #{fcnet_forward.1} parent=1 // pred_fallthru
      _
    // Predicated region
    $region38: #{fcnet_forward.1} parent=1 // pred_check
      _
    $region39: #{fcnet_forward.1} parent=1 // pred_check_branch
      %309 = sbr.rel (0) target = $region41
    $region40: #{fcnet_forward.1} parent=1 // pred_region
      %310 = dma.done [#allocation4], 128
    $region41: #{fcnet_forward.1} parent=1 // pred_fallthru
      _
    %311 = vsyncpa [#allocation3], 1
    %312 = vsyncpa [#allocation4], 1

</llo_original>
